<compile_context>
chip_gen: v5e
topology: v5e:2x2
jax: 0.10.0
libtpu: 0.0.40
codegen_flags: <defaults>
</compile_context>

<pallas_src>
import jax
import jax.numpy as jnp
from jax.experimental import pallas as pl
from jax.experimental.pallas import tpu as pltpu


def attention_kernel(s_ref, mask_ref, w1t_ref, b1_ref, w2_ref, b2_ref, o_ref):
    B, O, F = s_ref.shape
    H = w1t_ref.shape[1]

    s3 = s_ref[...]                                   # [B, O, F] f32
    s2 = s3.reshape(B * O, F)                         # flatten -> one big MXU matmul

    # Linear(F -> H) + tanh  (W1 already transposed to [F, H] in the wrapper)
    h = jnp.tanh(
        jnp.dot(s2, w1t_ref[...], preferred_element_type=jnp.float32)
        + b1_ref[...]
    )                                                 # [B*O, H]

    # Linear(H -> 1): width-1 output -> VPU multiply + lane reduction (no MXU pass).
    h3 = h.reshape(B, O, H)                           # cheap: O==sublane tile
    logw = jnp.sum(h3 * w2_ref[...], axis=-1) + b2_ref[0, 0]    # [B, O]

    valid = mask_ref[...] != 0                        # [B, O] bool (O on lanes)
    neg_inf = jnp.float32(-jnp.inf)
    logw_m = jnp.where(valid, logw, neg_inf)          # masked_fill(~mask, -inf)

    # softmax over the obstacle axis (lane-axis reductions)
    m = jnp.max(logw_m, axis=-1, keepdims=True)       # [B, 1]
    e = jnp.exp(logw_m - m)                           # [B, O]
    denom = jnp.sum(e, axis=-1, keepdims=True)        # [B, 1]
    w = e * pl.reciprocal(denom, approx=False)        # [B, O]
    w = jnp.where(valid, w, jnp.float32(0.0))         # masked_fill(~mask, 0)

    # einsum 'bof,bo->bf' : weighted sum of features over obstacles
    out = jnp.sum(s3 * w[:, :, None], axis=1)         # [B, F]
    o_ref[...] = out.astype(o_ref.dtype)


def attention_forward(s, mask_bool, w1, b1, w2, b2, *, block_b=32):
    """s: [N, O, F] f32, mask_bool: [N, O, 1] bool, w1: [H, F], b1: [1, H],
    w2: [1, H], b2: [1, 1]  ->  [N, F] f32."""
    N, O, F = s.shape
    H = w1.shape[0]

    mask_i32 = mask_bool[..., 0].astype(jnp.int32)    # [N, O], O on the lane axis

    # Pad N up to a multiple of block_b; padded rows get one valid obstacle so
    # the softmax stays finite (their outputs are sliced away below).
    Np = ((N + block_b - 1) // block_b) * block_b
    if Np != N:
        pad = Np - N
        s = jnp.pad(s, ((0, pad), (0, 0), (0, 0)))
        pad_mask = jnp.zeros((pad, O), jnp.int32).at[:, 0].set(1)
        mask_i32 = jnp.concatenate([mask_i32, pad_mask], axis=0)

    w1t = w1.T                                        # [F, H], pre-transposed

    grid = Np // block_b
    cost = pl.CostEstimate(
        flops=2 * Np * O * F * H + 2 * Np * O * H + 2 * Np * O * F,
        transcendentals=Np * O * H + Np * O,
        bytes_accessed=4 * (Np * O * F + Np * O + Np * F + F * H + 2 * H + 1),
    )

    out = pl.pallas_call(
        attention_kernel,
        out_shape=jax.ShapeDtypeStruct((Np, F), jnp.float32),
        grid_spec=pltpu.PrefetchScalarGridSpec(
            num_scalar_prefetch=0,
            grid=(grid,),
            in_specs=[
                pl.BlockSpec((block_b, O, F), lambda i: (i, 0, 0)),   # s
                pl.BlockSpec((block_b, O), lambda i: (i, 0)),         # mask [N, O]
                pl.BlockSpec((F, H), lambda i: (0, 0)),               # W1^T [F, H]
                pl.BlockSpec((1, H), lambda i: (0, 0)),               # b1
                pl.BlockSpec((1, H), lambda i: (0, 0)),               # W2 row [1, H]
                pl.BlockSpec(memory_space=pltpu.MemorySpace.SMEM),    # b2 scalar
            ],
            out_specs=pl.BlockSpec((block_b, F), lambda i: (i, 0)),   # [B, F] block
        ),
        compiler_params=pltpu.CompilerParams(
            dimension_semantics=("parallel",),
        ),
        cost_estimate=cost,
    )(s, mask_i32, w1t, b1, w2, b2)

    return out[:N]


def orthogonal_init(key, shape, gain=1.0):
    # deterministic (semi-)orthogonal matrix, matching nn.init.orthogonal_ semantics
    rows, cols = shape
    n = max(rows, cols)
    a = jax.random.normal(key, (n, n), dtype=jnp.float32)
    q, r = jnp.linalg.qr(a)
    q = q * jnp.sign(jnp.diagonal(r))[None, :]
    return (gain * q[:rows, :cols]).astype(jnp.float32)


def reference_forward(s, mask_bool, w1, b1, w2, b2):
    # pure-JAX reference of the torch module
    h = jnp.tanh(jnp.einsum('nof,hf->noh', s, w1) + b1)           # [N, O, H]
    log_w = jnp.einsum('noh,kh->nok', h, w2) + b2                 # [N, O, 1]
    log_w_m = jnp.where(mask_bool, log_w, -jnp.inf)
    w = jax.nn.softmax(log_w_m, axis=-2)
    w = jnp.where(mask_bool, w, 0.0)
    return jnp.einsum('nof,no->nf', s, w[..., 0])


if __name__ == "__main__":
    key = jax.random.PRNGKey(0)
    # batch N, obstacles O, feature_num F, hidden H
    N, O, F, H = 128, 8, 32, 32
    BLOCK_B = 32   # B*O = 256 rows per MXU pass; grid = 4 (>=2 keeps both v7x TCs busy)

    k_s, k_m, k_w1, k_w2 = jax.random.split(key, 4)

    s = jax.random.normal(k_s, (N, O, F), dtype=jnp.float32)
    mask_bool = jax.random.bernoulli(k_m, p=0.75, shape=(N, O, 1))
    # ensure at least one valid obstacle per batch (same caveat as the torch module)
    mask_bool = mask_bool.at[:, 0, :].set(True)

    # MLP(shape=(F, H, 1), act=Tanh, act_out=Identity, gain_out=1.0)
    w1 = orthogonal_init(k_w1, (H, F))            # Linear(F -> H), orthogonal, bias 0
    b1 = jnp.zeros((1, H), dtype=jnp.float32)
    w2 = orthogonal_init(k_w2, (1, H), gain=1.0)  # Linear(H -> 1), orthogonal(gain_out)
    b2 = jnp.zeros((1, 1), dtype=jnp.float32)

    out = attention_forward(s, mask_bool, w1, b1, w2, b2, block_b=BLOCK_B)
    out = jax.block_until_ready(out)

    ref = reference_forward(s, mask_bool, w1, b1[0], w2, b2[0])
    assert out.shape == (N, F)
    assert jnp.allclose(out, ref, atol=1e-4, rtol=1e-4), (
        float(jnp.max(jnp.abs(out - ref))))

    print("KERNEL_OK")
</pallas_src>

<mosaic_0001>
module attributes {stable_mosaic.version = 11 : i64} {
  func.func @attention_kernel(%arg0: i32, %arg1: memref<32x8x32xf32, #tpu.memory_space<vmem>>, %arg2: memref<32x8xi32, #tpu.memory_space<vmem>>, %arg3: memref<32x32xf32, #tpu.memory_space<vmem>>, %arg4: memref<1x32xf32, #tpu.memory_space<vmem>>, %arg5: memref<1x32xf32, #tpu.memory_space<vmem>>, %arg6: memref<1x1xf32, #tpu.memory_space<smem>>, %arg7: memref<32x32xf32, #tpu.memory_space<vmem>>) attributes {dimension_semantics = [#tpu.dimension_semantics<parallel>], iteration_bounds = array<i64: 4>, scalar_prefetch = 0 : i64, scratch_operands = 0 : i64, tpu.core_type = #tpu.core_type<tc>, window_params = [{transform_indices = @transform_0, window_bounds = array<i64: 32, 8, 32>}, {transform_indices = @transform_1, window_bounds = array<i64: 32, 8>}, {pipeline_mode = #tpu.pipeline_mode<synchronous>, transform_indices = @transform_2, window_bounds = array<i64: 32, 32>}, {pipeline_mode = #tpu.pipeline_mode<synchronous>, transform_indices = @transform_3, window_bounds = array<i64: 1, 32>}, {pipeline_mode = #tpu.pipeline_mode<synchronous>, transform_indices = @transform_4, window_bounds = array<i64: 1, 32>}, {transform_indices = @transform_5, window_bounds = array<i64: 1, 1>}, {transform_indices = @transform_6, window_bounds = array<i64: 32, 32>}]} {
    %c0 = arith.constant 0 : index
    %c0_0 = arith.constant 0 : index
    %c0_1 = arith.constant 0 : index
    %0 = vector.load %arg1[%c0, %c0_0, %c0_1] : memref<32x8x32xf32, #tpu.memory_space<vmem>>, vector<32x8x32xf32>
    %1 = vector.shape_cast %0 : vector<32x8x32xf32> to vector<256x32xf32>
    %c0_2 = arith.constant 0 : index
    %c0_3 = arith.constant 0 : index
    %2 = vector.load %arg3[%c0_2, %c0_3] : memref<32x32xf32, #tpu.memory_space<vmem>>, vector<32x32xf32>
    %cst = arith.constant dense<0.000000e+00> : vector<256x32xf32>
    %3 = tpu.matmul %1, %2, %cst {dimension_numbers = #tpu.dot_dimension_numbers<[1], [0], [0], [1], [0, 0, 1, 1], [], []>} : vector<256x32xf32>, vector<32x32xf32>, vector<256x32xf32> -> vector<256x32xf32>
    %c0_4 = arith.constant 0 : index
    %c0_5 = arith.constant 0 : index
    %4 = vector.load %arg4[%c0_4, %c0_5] : memref<1x32xf32, #tpu.memory_space<vmem>>, vector<1x32xf32>
    %5 = vector.broadcast %4 : vector<1x32xf32> to vector<256x32xf32>
    %6 = arith.addf %3, %5 : vector<256x32xf32>
    %7 = math.tanh %6 : vector<256x32xf32>
    %8 = vector.shape_cast %7 : vector<256x32xf32> to vector<32x8x32xf32>
    %c0_6 = arith.constant 0 : index
    %c0_7 = arith.constant 0 : index
    %9 = vector.load %arg5[%c0_6, %c0_7] : memref<1x32xf32, #tpu.memory_space<vmem>>, vector<1x32xf32>
    %10 = vector.shape_cast %9 : vector<1x32xf32> to vector<1x1x32xf32>
    %11 = vector.broadcast %10 : vector<1x1x32xf32> to vector<32x8x32xf32>
    %12 = arith.mulf %8, %11 : vector<32x8x32xf32>
    %cst_8 = arith.constant dense<0.000000e+00> : vector<32x8xf32>
    %13 = vector.multi_reduction <add>, %12, %cst_8 [2] : vector<32x8x32xf32> to vector<32x8xf32>
    %c0_9 = arith.constant 0 : index
    %c0_10 = arith.constant 0 : index
    %14 = memref.load %arg6[%c0_9, %c0_10] : memref<1x1xf32, #tpu.memory_space<smem>>
    %15 = vector.broadcast %14 : f32 to vector<32x8xf32>
    %16 = arith.addf %13, %15 : vector<32x8xf32>
    %c0_11 = arith.constant 0 : index
    %c0_12 = arith.constant 0 : index
    %17 = vector.load %arg2[%c0_11, %c0_12] : memref<32x8xi32, #tpu.memory_space<vmem>>, vector<32x8xi32>
    %c0_i32 = arith.constant 0 : i32
    %18 = vector.broadcast %c0_i32 : i32 to vector<32x8xi32>
    %19 = arith.cmpi ne, %17, %18 : vector<32x8xi32>
    %cst_13 = arith.constant 0xFF800000 : f32
    %20 = vector.broadcast %cst_13 : f32 to vector<32x8xf32>
    %21 = arith.select %19, %16, %20 : vector<32x8xi1>, vector<32x8xf32>
    %cst_14 = arith.constant dense<0xFF800000> : vector<32xf32>
    %22 = vector.multi_reduction <maximumf>, %21, %cst_14 [1] : vector<32x8xf32> to vector<32xf32>
    %23 = vector.shape_cast %22 : vector<32xf32> to vector<32x1xf32>
    %24 = vector.broadcast %23 : vector<32x1xf32> to vector<32x8xf32>
    %25 = arith.subf %21, %24 : vector<32x8xf32>
    %26 = math.exp %25 : vector<32x8xf32>
    %cst_15 = arith.constant dense<0.000000e+00> : vector<32xf32>
    %27 = vector.multi_reduction <add>, %26, %cst_15 [1] : vector<32x8xf32> to vector<32xf32>
    %28 = vector.shape_cast %27 : vector<32xf32> to vector<32x1xf32>
    %29 = tpu.reciprocal %28 : vector<32x1xf32> -> vector<32x1xf32>
    %30 = vector.broadcast %29 : vector<32x1xf32> to vector<32x8xf32>
    %31 = arith.mulf %26, %30 : vector<32x8xf32>
    %cst_16 = arith.constant 0.000000e+00 : f32
    %32 = vector.broadcast %cst_16 : f32 to vector<32x8xf32>
    %33 = arith.select %19, %31, %32 : vector<32x8xi1>, vector<32x8xf32>
    %34 = vector.shape_cast %33 : vector<32x8xf32> to vector<32x8x1xf32>
    %35 = vector.broadcast %34 : vector<32x8x1xf32> to vector<32x8x32xf32>
    %36 = arith.mulf %0, %35 : vector<32x8x32xf32>
    %cst_17 = arith.constant dense<0.000000e+00> : vector<32x32xf32>
    %37 = vector.multi_reduction <add>, %36, %cst_17 [1] : vector<32x8x32xf32> to vector<32x32xf32>
    %c0_18 = arith.constant 0 : index
    %c0_19 = arith.constant 0 : index
    %38 = vector.load %arg7[%c0_18, %c0_19] : memref<32x32xf32, #tpu.memory_space<vmem>>, vector<32x32xf32>
    tpu.vector_store %arg7[%c0_18, %c0_19], %37 {strides = array<i32>} : memref<32x32xf32, #tpu.memory_space<vmem>>, vector<32x32xf32>,
    return
  }
  func.func @transform_0(%arg0: i32) -> (i32, i32, i32) {
    %c0_i32 = arith.constant 0 : i32
    %c0_i32_0 = arith.constant 0 : i32
    %c0_i32_1 = arith.constant 0 : i32
    return %arg0, %c0_i32, %c0_i32_0 : i32, i32, i32
  }
  func.func @transform_1(%arg0: i32) -> (i32, i32) {
    %c0_i32 = arith.constant 0 : i32
    %c0_i32_0 = arith.constant 0 : i32
    return %arg0, %c0_i32 : i32, i32
  }
  func.func @transform_2(%arg0: i32) -> (i32, i32) {
    %c0_i32 = arith.constant 0 : i32
    %c0_i32_0 = arith.constant 0 : i32
    %c0_i32_1 = arith.constant 0 : i32
    return %c0_i32, %c0_i32_0 : i32, i32
  }
  func.func @transform_3(%arg0: i32) -> (i32, i32) {
    %c0_i32 = arith.constant 0 : i32
    %c0_i32_0 = arith.constant 0 : i32
    %c0_i32_1 = arith.constant 0 : i32
    return %c0_i32, %c0_i32_0 : i32, i32
  }
  func.func @transform_4(%arg0: i32) -> (i32, i32) {
    %c0_i32 = arith.constant 0 : i32
    %c0_i32_0 = arith.constant 0 : i32
    %c0_i32_1 = arith.constant 0 : i32
    return %c0_i32, %c0_i32_0 : i32, i32
  }
  func.func @transform_5(%arg0: i32) -> (i32, i32) {
    %c0_i32 = arith.constant 0 : i32
    %c0_i32_0 = arith.constant 0 : i32
    %c0_i32_1 = arith.constant 0 : i32
    return %c0_i32, %c0_i32_0 : i32, i32
  }
  func.func @transform_6(%arg0: i32) -> (i32, i32) {
    %c0_i32 = arith.constant 0 : i32
    %c0_i32_0 = arith.constant 0 : i32
    return %arg0, %c0_i32 : i32, i32
  }
}

</mosaic_0001>

<llo_original>
// kernel: tpu_custom_call.1
$region0: #{tpu_custom_call.1}
  #allocation0 [shape = 'u32[]', space=smem, size = 0x4, offset = 0x4, fixed_abs, tag = 'smem constant byte address 0x4 - core index']
  #allocation1 [shape = 'u32[72,128]{1,0:T(1,128)}', space=vmem, size = 0x9000, scoped, tag = 'internal scratch']
  #allocation2 [shape = 'f32[1,1]{1,0:T(1,128)S(6)}', space=smem, size = 0x200, scoped, tag = 'scoped memory for tpu_custom_call.1']
  %s0 = inlined_call_operand.vmem [shape: f32[128,8,32], index: 0, kind: input, shape index: {}]
  %s1 = inlined_call_operand.vmem [shape: s32[128,8], index: 1, kind: input, shape index: {}]
  %s2 = inlined_call_operand.vmem [shape: f32[32,32], index: 2, kind: input, shape index: {}]
  %s3 = inlined_call_operand.vmem [shape: f32[1,32], index: 3, kind: input, shape index: {}]
  %s4 = inlined_call_operand.vmem [shape: f32[1,32], index: 4, kind: input, shape index: {}]
  %s5 = inlined_call_operand.<no memory space> [shape: f32[1,1], index: 5, kind: input, shape index: {}]
  %s6 = inlined_call_operand.vmem [shape: f32[128,32], index: 6, kind: output, shape index: {}]
  %s7 = sld [smem:[#allocation0]]
  $region57: #{tpu_custom_call.1} parent=0
    _
  %s9 = ssub.s32 1, %s7
  %s10 = scalar_select 0, %s9, %s7
  %11 = sst [smem:[#allocation2]] %s5
  loop: start=0, step=1, limit=6
  $region2: #{tpu_custom_call.1} parent=0 // loop_pre_header
    _
  $region3: #{tpu_custom_call.1} parent=0 // loop_header
    %s13 = sphi 0, %s17
    %p14 = scmp.ge.s32.totalorder %s13, 6
    %s23 = sphi 0, %s25
    %s26 = sphi 0, %s23
    %s27 = sphi 0, %s26
    %s43 = sphi 0, %s27
    %s49 = sphi 0, %s51
    %s52 = sphi 0, %s49
    %s53 = sphi 0, %s52
    %s69 = sphi 0, %s53
    %s73 = sphi 0, %s73
    %s75 = sphi 0, %s73
    %s76 = sphi 0, %s75
    %s90 = sphi 0, %s76
    %s94 = sphi 0, %s94
    %s96 = sphi 0, %s94
    %s97 = sphi 0, %s96
    %s111 = sphi 0, %s97
    %s115 = sphi 0, %s115
    %s117 = sphi 0, %s115
    %s118 = sphi 0, %s117
    %s132 = sphi 0, %s118
    %s136 = sphi 0, %s136
    %s138 = sphi 0, %s136
    %s139 = sphi 0, %s138
    %s153 = sphi 0, %s139
    %s159 = sphi 0, %s161
    %s162 = sphi 0, %s159
    %s163 = sphi 0, %s162
    %s179 = sphi 0, %s163
  $region4: #{tpu_custom_call.1} parent=0 // loop_header_branch
    %16 = sbr.rel (%p14) target = $region8
  $region5: #{tpu_custom_call.1} parent=0 // loop_body
    %s18 = ssub.s32 %s13, 1
    %s19 = ssub.s32 %s13, 2
    %s20 = sadd.s32 %s13, 1
    %s21 = ssub.s32 %s13, %s20
    %p22 = scmp.eq.s32.totalorder %s21, 0
    %s24 = sadd.s32 %s23, 1
    %s25 = scalar_select %p22, %s23, %s24
    %p28 = pneg %p22
    %p29 = scmp.eq.s32.totalorder %s13, 3
    %p30 = por %p28, %p29
    %p31 = scmp.ne.s32.totalorder %s23, %s26
    %p32 = scmp.eq.s32.totalorder %s13, 0
    %p33 = por %p31, %p32
    %p34 = scmp.ne.s32.totalorder %s23, %s26
    %p35 = scmp.eq.s32.totalorder %s18, 3
    %p36 = por %p34, %p35
    %p37 = scmp.ne.s32.totalorder %s26, %s27
    %p38 = scmp.eq.s32.totalorder %s18, 0
    %p39 = por %p37, %p38
    %p40 = scmp.ne.s32.totalorder %s26, %s27
    %p41 = scmp.eq.s32.totalorder %s19, 3
    %p42 = por %p40, %p41
    %p44 = scmp.ne.s32.totalorder %s27, %s43
    %p45 = scmp.eq.s32.totalorder %s19, 0
    %p46 = por %p44, %p45
    %s47 = ssub.s32 %s13, %s20
    %p48 = scmp.eq.s32.totalorder %s47, 0
    %s50 = sadd.s32 %s49, 1
    %s51 = scalar_select %p48, %s49, %s50
    %p54 = pneg %p48
    %p55 = scmp.eq.s32.totalorder %s13, 3
    %p56 = por %p54, %p55
    %p57 = scmp.ne.s32.totalorder %s49, %s52
    %p58 = scmp.eq.s32.totalorder %s13, 0
    %p59 = por %p57, %p58
    %p60 = scmp.ne.s32.totalorder %s49, %s52
    %p61 = scmp.eq.s32.totalorder %s18, 3
    %p62 = por %p60, %p61
    %p63 = scmp.ne.s32.totalorder %s52, %s53
    %p64 = scmp.eq.s32.totalorder %s18, 0
    %p65 = por %p63, %p64
    %p66 = scmp.ne.s32.totalorder %s52, %s53
    %p67 = scmp.eq.s32.totalorder %s19, 3
    %p68 = por %p66, %p67
    %p70 = scmp.ne.s32.totalorder %s53, %s69
    %p71 = scmp.eq.s32.totalorder %s19, 0
    %p72 = por %p70, %p71
    %s74 = sadd.s32 %s73, 1
    %p77 = scmp.eq.s32.totalorder %s13, 3
    %p78 = scmp.ne.s32.totalorder %s73, %s75
    %p79 = scmp.eq.s32.totalorder %s13, 0
    %p80 = por %p78, %p79
    %p81 = scmp.ne.s32.totalorder %s73, %s75
    %p82 = scmp.eq.s32.totalorder %s18, 3
    %p83 = por %p81, %p82
    %p84 = scmp.ne.s32.totalorder %s75, %s76
    %p85 = scmp.eq.s32.totalorder %s18, 0
    %p86 = por %p84, %p85
    %p87 = scmp.ne.s32.totalorder %s75, %s76
    %p88 = scmp.eq.s32.totalorder %s19, 3
    %p89 = por %p87, %p88
    %p91 = scmp.ne.s32.totalorder %s76, %s90
    %p92 = scmp.eq.s32.totalorder %s19, 0
    %p93 = por %p91, %p92
    %s95 = sadd.s32 %s94, 1
    %p98 = scmp.eq.s32.totalorder %s13, 3
    %p99 = scmp.ne.s32.totalorder %s94, %s96
    %p100 = scmp.eq.s32.totalorder %s13, 0
    %p101 = por %p99, %p100
    %p102 = scmp.ne.s32.totalorder %s94, %s96
    %p103 = scmp.eq.s32.totalorder %s18, 3
    %p104 = por %p102, %p103
    %p105 = scmp.ne.s32.totalorder %s96, %s97
    %p106 = scmp.eq.s32.totalorder %s18, 0
    %p107 = por %p105, %p106
    %p108 = scmp.ne.s32.totalorder %s96, %s97
    %p109 = scmp.eq.s32.totalorder %s19, 3
    %p110 = por %p108, %p109
    %p112 = scmp.ne.s32.totalorder %s97, %s111
    %p113 = scmp.eq.s32.totalorder %s19, 0
    %p114 = por %p112, %p113
    %s116 = sadd.s32 %s115, 1
    %p119 = scmp.eq.s32.totalorder %s13, 3
    %p120 = scmp.ne.s32.totalorder %s115, %s117
    %p121 = scmp.eq.s32.totalorder %s13, 0
    %p122 = por %p120, %p121
    %p123 = scmp.ne.s32.totalorder %s115, %s117
    %p124 = scmp.eq.s32.totalorder %s18, 3
    %p125 = por %p123, %p124
    %p126 = scmp.ne.s32.totalorder %s117, %s118
    %p127 = scmp.eq.s32.totalorder %s18, 0
    %p128 = por %p126, %p127
    %p129 = scmp.ne.s32.totalorder %s117, %s118
    %p130 = scmp.eq.s32.totalorder %s19, 3
    %p131 = por %p129, %p130
    %p133 = scmp.ne.s32.totalorder %s118, %s132
    %p134 = scmp.eq.s32.totalorder %s19, 0
    %p135 = por %p133, %p134
    %s137 = sadd.s32 %s136, 1
    %p140 = scmp.eq.s32.totalorder %s13, 3
    %p141 = scmp.ne.s32.totalorder %s136, %s138
    %p142 = scmp.eq.s32.totalorder %s13, 0
    %p143 = por %p141, %p142
    %p144 = scmp.ne.s32.totalorder %s136, %s138
    %p145 = scmp.eq.s32.totalorder %s18, 3
    %p146 = por %p144, %p145
    %p147 = scmp.ne.s32.totalorder %s138, %s139
    %p148 = scmp.eq.s32.totalorder %s18, 0
    %p149 = por %p147, %p148
    %p150 = scmp.ne.s32.totalorder %s138, %s139
    %p151 = scmp.eq.s32.totalorder %s19, 3
    %p152 = por %p150, %p151
    %p154 = scmp.ne.s32.totalorder %s139, %s153
    %p155 = scmp.eq.s32.totalorder %s19, 0
    %p156 = por %p154, %p155
    %s157 = ssub.s32 %s13, %s20
    %p158 = scmp.eq.s32.totalorder %s157, 0
    %s160 = sadd.s32 %s159, 1
    %s161 = scalar_select %p158, %s159, %s160
    %p164 = pneg %p158
    %p165 = scmp.eq.s32.totalorder %s13, 3
    %p166 = por %p164, %p165
    %p167 = scmp.ne.s32.totalorder %s159, %s162
    %p168 = scmp.eq.s32.totalorder %s13, 0
    %p169 = por %p167, %p168
    %p170 = scmp.ne.s32.totalorder %s159, %s162
    %p171 = scmp.eq.s32.totalorder %s18, 3
    %p172 = por %p170, %p171
    %p173 = scmp.ne.s32.totalorder %s162, %s163
    %p174 = scmp.eq.s32.totalorder %s18, 0
    %p175 = por %p173, %p174
    %p176 = scmp.ne.s32.totalorder %s162, %s163
    %p177 = scmp.eq.s32.totalorder %s19, 3
    %p178 = por %p176, %p177
    %p180 = scmp.ne.s32.totalorder %s163, %s179
    %p181 = scmp.eq.s32.totalorder %s19, 0
    %p182 = por %p180, %p181
    %p183 = scmp.le.s32.totalorder 1, %s13
    %p184 = scmp.lt.s32.totalorder %s13, 5
    %p185 = pnand %p183, %p184
    %p186 = pneg %p185
    // Predicated region
    $region9: #{tpu_custom_call.1} parent=5 // pred_check
      _
    $region10: #{tpu_custom_call.1} parent=5 // pred_check_branch
      %188 = sbr.rel (%p185) target = $region12
    $region11: #{tpu_custom_call.1} parent=5 // pred_region
      %s189 = ssub.s32 %s13, 1
      // Predicated region
      $region13: #{tpu_custom_call.1} parent=11 // pred_check
        %p190 = pneg %p86
      $region14: #{tpu_custom_call.1} parent=11 // pred_check_branch
        %192 = sbr.rel (%p190) target = $region16
      $region15: #{tpu_custom_call.1} parent=11 // pred_region
        _
      $region16: #{tpu_custom_call.1} parent=11 // pred_fallthru
        _
      // Predicated region
      $region17: #{tpu_custom_call.1} parent=11 // pred_check
        %p193 = pneg %p107
      $region18: #{tpu_custom_call.1} parent=11 // pred_check_branch
        %195 = sbr.rel (%p193) target = $region20
      $region19: #{tpu_custom_call.1} parent=11 // pred_region
        _
      $region20: #{tpu_custom_call.1} parent=11 // pred_fallthru
        _
      // Predicated region
      $region21: #{tpu_custom_call.1} parent=11 // pred_check
        %p196 = pneg %p128
      $region22: #{tpu_custom_call.1} parent=11 // pred_check_branch
        %198 = sbr.rel (%p196) target = $region24
      $region23: #{tpu_custom_call.1} parent=11 // pred_region
        _
      $region24: #{tpu_custom_call.1} parent=11 // pred_fallthru
        _
      // Predicated region
      $region25: #{tpu_custom_call.1} parent=11 // pred_check
        %p199 = pneg %p149
      $region26: #{tpu_custom_call.1} parent=11 // pred_check_branch
        %201 = sbr.rel (%p199) target = $region28
      $region27: #{tpu_custom_call.1} parent=11 // pred_region
        _
      $region28: #{tpu_custom_call.1} parent=11 // pred_fallthru
        _
    $region12: #{tpu_custom_call.1} parent=5 // pred_fallthru
      _
    %p202 = scmp.lt.s32.totalorder %s13, 4
    // Predicated region
    $region29: #{tpu_custom_call.1} parent=5 // pred_check
      %p203 = pneg %p202
    $region30: #{tpu_custom_call.1} parent=5 // pred_check_branch
      %205 = sbr.rel (%p203) target = $region32
    $region31: #{tpu_custom_call.1} parent=5 // pred_region
      // Predicated region
      $region33: #{tpu_custom_call.1} parent=31 // pred_check
        %p206 = pneg %p33
      $region34: #{tpu_custom_call.1} parent=31 // pred_check_branch
        %208 = sbr.rel (%p206) target = $region36
      $region35: #{tpu_custom_call.1} parent=31 // pred_region
        %s209 = smul.u32 32, %s13
        %p210 = scmp.lt.s32.totalorder %s209, 127
        %s211 = scalar_select %p210, %s209, 127
        %s212 = smul.addr %s211, 8
        %s213 = scalar_lea.vmem %s0, %s212
        %s214 = smul.u32 32, %s13
      $region36: #{tpu_custom_call.1} parent=31 // pred_fallthru
        _
      // Predicated region
      $region37: #{tpu_custom_call.1} parent=31 // pred_check
        %p215 = pneg %p59
      $region38: #{tpu_custom_call.1} parent=31 // pred_check_branch
        %217 = sbr.rel (%p215) target = $region40
      $region39: #{tpu_custom_call.1} parent=31 // pred_region
        %s218 = smul.u32 4, %s13
        %p219 = scmp.lt.s32.totalorder %s218, 15
        %s220 = scalar_select %p219, %s218, 15
        %s221 = smul.addr %s220, 8
        %s222 = scalar_lea.vmem %s1, %s221
        %s223 = smul.u32 4, %s13
      $region40: #{tpu_custom_call.1} parent=31 // pred_fallthru
        _
    $region32: #{tpu_custom_call.1} parent=5 // pred_fallthru
      _
    %p224 = scmp.le.s32.totalorder 1, %s13
    %p225 = scmp.lt.s32.totalorder %s13, 5
    %p226 = pnand %p224, %p225
    %p227 = pneg %p226
    // Predicated region
    $region41: #{tpu_custom_call.1} parent=5 // pred_check
      _
    $region42: #{tpu_custom_call.1} parent=5 // pred_check_branch
      %229 = sbr.rel (%p226) target = $region44
    $region43: #{tpu_custom_call.1} parent=5 // pred_region
      %s230 = ssub.s32 %s13, 1
      %s231 = smul.u32 32, %s18
      %p232 = scmp.lt.s32.totalorder %s231, 127
      %s233 = scalar_select %p232, %s231, 127
      %s234 = smul.addr %s233, 8
      %s235 = scalar_lea.vmem %s0, %s234
      %p236 = pneg %p39
      %p237 = pneg %p36
      %s238 = smul.u32 4, %s18
      %p239 = scmp.lt.s32.totalorder %s238, 15
      %s240 = scalar_select %p239, %s238, 15
      %s241 = smul.addr %s240, 8
      %s242 = scalar_lea.vmem %s1, %s241
      %p243 = pneg %p65
      %p244 = pneg %p62
      %p245 = pneg %p86
      %p246 = pneg %p83
      %p247 = pneg %p107
      %p248 = pneg %p104
      %p249 = pneg %p128
      %p250 = pneg %p125
      %p251 = pneg %p149
      %p252 = pneg %p146
      %p253 = pneg %p175
      %p254 = pneg %p172
      %s255 = smul.u32 4, %s18
      %p256 = scmp.lt.s32.totalorder %s255, 15
      %s257 = scalar_select %p256, %s255, 15
      %s258 = smul.addr %s257, 8
      %s259 = scalar_lea.vmem %s6, %s258
      %s260 = smul.u32 32, %s18
      %p261 = scmp.lt.s32.totalorder %s260, 127
      %s262 = scalar_select %p261, %s260, 127
      %s263 = smul.addr %s262, 8
      %s264 = scalar_lea.vmem %s0, %s263
      %s265 = smul.u32 32, %s18
      %s266 = smul.u32 4, %s18
      %p267 = scmp.lt.s32.totalorder %s266, 15
      %s268 = scalar_select %p267, %s266, 15
      %s269 = smul.addr %s268, 8
      %s270 = scalar_lea.vmem %s1, %s269
      %s271 = smul.u32 4, %s18
      %s272 = smul.u32 4, %s18
      %p273 = scmp.lt.s32.totalorder %s272, 15
      %s274 = scalar_select %p273, %s272, 15
      %s275 = smul.addr %s274, 8
      %s276 = scalar_lea.vmem %s6, %s275
      %s277 = smul.u32 4, %s18
      %v278 = vld [vmem:[%s264] sm:$0xff]
      %v279 = vld [vmem:[%s264 + $0x8] sm:$0xff]
      %v280 = vld [vmem:[%s264 + $0x10] sm:$0xff]
      %v281 = vld [vmem:[%s264 + $0x18] sm:$0xff]
      %v282 = vld [vmem:[%s264 + $0x20] sm:$0xff]
      %v283 = vld [vmem:[%s264 + $0x28] sm:$0xff]
      %v284 = vld [vmem:[%s264 + $0x30] sm:$0xff]
      %v285 = vld [vmem:[%s264 + $0x38] sm:$0xff]
      %v286 = vld [vmem:[%s264 + $0x40] sm:$0xff]
      %v287 = vld [vmem:[%s264 + $0x48] sm:$0xff]
      %v288 = vld [vmem:[%s264 + $0x50] sm:$0xff]
      %v289 = vld [vmem:[%s264 + $0x58] sm:$0xff]
      %v290 = vld [vmem:[%s264 + $0x60] sm:$0xff]
      %v291 = vld [vmem:[%s264 + $0x68] sm:$0xff]
      %v292 = vld [vmem:[%s264 + $0x70] sm:$0xff]
      %v293 = vld [vmem:[%s264 + $0x78] sm:$0xff]
      %v294 = vld [vmem:[%s264 + $0x80] sm:$0xff]
      %v295 = vld [vmem:[%s264 + $0x88] sm:$0xff]
      %v296 = vld [vmem:[%s264 + $0x90] sm:$0xff]
      %v297 = vld [vmem:[%s264 + $0x98] sm:$0xff]
      %v298 = vld [vmem:[%s264 + $0xa0] sm:$0xff]
      %v299 = vld [vmem:[%s264 + $0xa8] sm:$0xff]
      %v300 = vld [vmem:[%s264 + $0xb0] sm:$0xff]
      %v301 = vld [vmem:[%s264 + $0xb8] sm:$0xff]
      %v302 = vld [vmem:[%s264 + $0xc0] sm:$0xff]
      %v303 = vld [vmem:[%s264 + $0xc8] sm:$0xff]
      %v304 = vld [vmem:[%s264 + $0xd0] sm:$0xff]
      %v305 = vld [vmem:[%s264 + $0xd8] sm:$0xff]
      %v306 = vld [vmem:[%s264 + $0xe0] sm:$0xff]
      %v307 = vld [vmem:[%s264 + $0xe8] sm:$0xff]
      %v308 = vld [vmem:[%s264 + $0xf0] sm:$0xff]
      %v309 = vld [vmem:[%s264 + $0xf8] sm:$0xff]
      %v310 = vld [vmem:[%s2] sm:$0xff]
      %v311 = vld [vmem:[%s2 + $0x8] sm:$0xff]
      %v312 = vld [vmem:[%s2 + $0x10] sm:$0xff]
      %v313 = vld [vmem:[%s2 + $0x18] sm:$0xff]
      %v314 = vld [vmem:[%s3] sm:$0x1]
      %v316 = vperm.slane %v314, 0
      %vm318 = vcmask 261120
      %v320 = vsel %vm318, %v278, 0
      %v323 = vsel %vm318, %v279, 0
      %v326 = vsel %vm318, %v280, 0
      %v329 = vsel %vm318, %v281, 0
      %v332 = vsel %vm318, %v282, 0
      %v335 = vsel %vm318, %v283, 0
      %v338 = vsel %vm318, %v284, 0
      %v341 = vsel %vm318, %v285, 0
      %v344 = vsel %vm318, %v286, 0
      %v347 = vsel %vm318, %v287, 0
      %v350 = vsel %vm318, %v288, 0
      %v353 = vsel %vm318, %v289, 0
      %v356 = vsel %vm318, %v290, 0
      %v359 = vsel %vm318, %v291, 0
      %v362 = vsel %vm318, %v292, 0
      %v365 = vsel %vm318, %v293, 0
      %v368 = vsel %vm318, %v294, 0
      %v371 = vsel %vm318, %v295, 0
      %v374 = vsel %vm318, %v296, 0
      %v377 = vsel %vm318, %v297, 0
      %v380 = vsel %vm318, %v298, 0
      %v383 = vsel %vm318, %v299, 0
      %v386 = vsel %vm318, %v300, 0
      %v389 = vsel %vm318, %v301, 0
      %v392 = vsel %vm318, %v302, 0
      %v395 = vsel %vm318, %v303, 0
      %v398 = vsel %vm318, %v304, 0
      %v401 = vsel %vm318, %v305, 0
      %v404 = vsel %vm318, %v306, 0
      %v407 = vsel %vm318, %v307, 0
      %v410 = vsel %vm318, %v308, 0
      %v413 = vsel %vm318, %v309, 0
      %415 = vmatpush.msra.mxu0 0.0
      %416 = vmatpush.msra.mxu0 0.0
      %417 = vmatpush.msra.mxu0 0.0
      %418 = vmatpush.msra.mxu0 0.0
      %419 = vmatpush.msra.mxu0 0.0
      %420 = vmatpush.msra.mxu0 0.0
      %421 = vmatpush.msra.mxu0 0.0
      %422 = vmatpush.msra.mxu0 0.0
      %423 = vmatpush.msra.mxu0 0.0
      %424 = vmatpush.msra.mxu0 0.0
      %425 = vmatpush.msra.mxu0 0.0
      %426 = vmatpush.msra.mxu0 0.0
      %427 = vmatpush.msra.mxu0 %v313
      %428 = vmatpush.msra.mxu0 %v312
      %429 = vmatpush.msra.mxu0 %v311
      %430 = vmatpush.msra.mxu0 %v310
      %431 = vmatmul.f32.gmra.mxu0 %v320
      %v432 = vpop.f32.mrf.mxu0
      %v433 = vadd.f32 %v316, %v432
      %434 = vmatmul.f32.gmra.mxu0 %v323
      %v435 = vpop.f32.mrf.mxu0
      %v436 = vadd.f32 %v316, %v435
      %437 = vmatmul.f32.gmra.mxu0 %v326
      %v438 = vpop.f32.mrf.mxu0
      %v439 = vadd.f32 %v316, %v438
      %440 = vmatmul.f32.gmra.mxu0 %v329
      %v441 = vpop.f32.mrf.mxu0
      %v442 = vadd.f32 %v316, %v441
      %443 = vmatmul.f32.gmra.mxu0 %v332
      %v444 = vpop.f32.mrf.mxu0
      %v445 = vadd.f32 %v316, %v444
      %446 = vmatmul.f32.gmra.mxu0 %v335
      %v447 = vpop.f32.mrf.mxu0
      %v448 = vadd.f32 %v316, %v447
      %449 = vmatmul.f32.gmra.mxu0 %v338
      %v450 = vpop.f32.mrf.mxu0
      %v451 = vadd.f32 %v316, %v450
      %452 = vmatmul.f32.gmra.mxu0 %v341
      %v453 = vpop.f32.mrf.mxu0
      %v454 = vadd.f32 %v316, %v453
      %455 = vmatmul.f32.gmra.mxu0 %v344
      %v456 = vpop.f32.mrf.mxu0
      %v457 = vadd.f32 %v316, %v456
      %458 = vmatmul.f32.gmra.mxu0 %v347
      %v459 = vpop.f32.mrf.mxu0
      %v460 = vadd.f32 %v316, %v459
      %461 = vmatmul.f32.gmra.mxu0 %v350
      %v462 = vpop.f32.mrf.mxu0
      %v463 = vadd.f32 %v316, %v462
      %464 = vmatmul.f32.gmra.mxu0 %v353
      %v465 = vpop.f32.mrf.mxu0
      %v466 = vadd.f32 %v316, %v465
      %467 = vmatmul.f32.gmra.mxu0 %v356
      %v468 = vpop.f32.mrf.mxu0
      %v469 = vadd.f32 %v316, %v468
      %470 = vmatmul.f32.gmra.mxu0 %v359
      %v471 = vpop.f32.mrf.mxu0
      %v472 = vadd.f32 %v316, %v471
      %473 = vmatmul.f32.gmra.mxu0 %v362
      %v474 = vpop.f32.mrf.mxu0
      %v475 = vadd.f32 %v316, %v474
      %476 = vmatmul.f32.gmra.mxu0 %v365
      %v477 = vpop.f32.mrf.mxu0
      %v478 = vadd.f32 %v316, %v477
      %479 = vmatmul.f32.gmra.mxu0 %v368
      %v480 = vpop.f32.mrf.mxu0
      %v481 = vadd.f32 %v316, %v480
      %482 = vmatmul.f32.gmra.mxu0 %v371
      %v483 = vpop.f32.mrf.mxu0
      %v484 = vadd.f32 %v316, %v483
      %485 = vmatmul.f32.gmra.mxu0 %v374
      %v486 = vpop.f32.mrf.mxu0
      %v487 = vadd.f32 %v316, %v486
      %488 = vmatmul.f32.gmra.mxu0 %v377
      %v489 = vpop.f32.mrf.mxu0
      %v490 = vadd.f32 %v316, %v489
      %491 = vmatmul.f32.gmra.mxu0 %v380
      %v492 = vpop.f32.mrf.mxu0
      %v493 = vadd.f32 %v316, %v492
      %494 = vmatmul.f32.gmra.mxu0 %v383
      %v495 = vpop.f32.mrf.mxu0
      %v496 = vadd.f32 %v316, %v495
      %497 = vmatmul.f32.gmra.mxu0 %v386
      %v498 = vpop.f32.mrf.mxu0
      %v499 = vadd.f32 %v316, %v498
      %500 = vmatmul.f32.gmra.mxu0 %v389
      %v501 = vpop.f32.mrf.mxu0
      %v502 = vadd.f32 %v316, %v501
      %503 = vmatmul.f32.gmra.mxu0 %v392
      %v504 = vpop.f32.mrf.mxu0
      %v505 = vadd.f32 %v316, %v504
      %506 = vmatmul.f32.gmra.mxu0 %v395
      %v507 = vpop.f32.mrf.mxu0
      %v508 = vadd.f32 %v316, %v507
      %509 = vmatmul.f32.gmra.mxu0 %v398
      %v510 = vpop.f32.mrf.mxu0
      %v511 = vadd.f32 %v316, %v510
      %512 = vmatmul.f32.gmra.mxu0 %v401
      %v513 = vpop.f32.mrf.mxu0
      %v514 = vadd.f32 %v316, %v513
      %515 = vmatmul.f32.gmra.mxu0 %v404
      %v516 = vpop.f32.mrf.mxu0
      %v517 = vadd.f32 %v316, %v516
      %518 = vmatmul.f32.gmra.mxu0 %v407
      %v519 = vpop.f32.mrf.mxu0
      %v520 = vadd.f32 %v316, %v519
      %521 = vmatmul.f32.gmra.mxu0 %v410
      %v522 = vpop.f32.mrf.mxu0
      %v523 = vadd.f32 %v316, %v522
      %524 = vmatmul.f32.gmra.mxu0 %v413
      %v525 = vpop.f32.mrf.mxu0
      %v526 = vadd.f32 %v316, %v525
      %527 = vdwg.mxu0
      %v528 = vtanh.pop %v433
      %v529 = vtanh.pop %v436
      %v530 = vtanh.pop %v439
      %v531 = vtanh.pop %v442
      %v532 = vtanh.pop %v445
      %v533 = vtanh.pop %v448
      %v534 = vtanh.pop %v451
      %v535 = vtanh.pop %v454
      %v536 = vtanh.pop %v457
      %v537 = vtanh.pop %v460
      %v538 = vtanh.pop %v463
      %v539 = vtanh.pop %v466
      %v540 = vtanh.pop %v469
      %v541 = vtanh.pop %v472
      %v542 = vtanh.pop %v475
      %v543 = vtanh.pop %v478
      %v544 = vtanh.pop %v481
      %v545 = vtanh.pop %v484
      %v546 = vtanh.pop %v487
      %v547 = vtanh.pop %v490
      %v548 = vtanh.pop %v493
      %v549 = vtanh.pop %v496
      %v550 = vtanh.pop %v499
      %v551 = vtanh.pop %v502
      %v552 = vtanh.pop %v505
      %v553 = vtanh.pop %v508
      %v554 = vtanh.pop %v511
      %v555 = vtanh.pop %v514
      %v556 = vtanh.pop %v517
      %v557 = vtanh.pop %v520
      %v558 = vtanh.pop %v523
      %v559 = vtanh.pop %v526
      %v560 = vld [vmem:[%s4] sm:$0x1]
      %v562 = vperm.slane %v560, 0
      %v564 = vmul.f32 %v528, %v562
      %v565 = vmul.f32 %v529, %v562
      %v566 = vmul.f32 %v530, %v562
      %v567 = vmul.f32 %v531, %v562
      %v568 = vmul.f32 %v532, %v562
      %v569 = vmul.f32 %v533, %v562
      %v570 = vmul.f32 %v534, %v562
      %v571 = vmul.f32 %v535, %v562
      %v572 = vmul.f32 %v536, %v562
      %v573 = vmul.f32 %v537, %v562
      %v574 = vmul.f32 %v538, %v562
      %v575 = vmul.f32 %v539, %v562
      %v576 = vmul.f32 %v540, %v562
      %v577 = vmul.f32 %v541, %v562
      %v578 = vmul.f32 %v542, %v562
      %v579 = vmul.f32 %v543, %v562
      %v580 = vmul.f32 %v544, %v562
      %v581 = vmul.f32 %v545, %v562
      %v582 = vmul.f32 %v546, %v562
      %v583 = vmul.f32 %v547, %v562
      %v584 = vmul.f32 %v548, %v562
      %v585 = vmul.f32 %v549, %v562
      %v586 = vmul.f32 %v550, %v562
      %v587 = vmul.f32 %v551, %v562
      %v588 = vmul.f32 %v552, %v562
      %v589 = vmul.f32 %v553, %v562
      %v590 = vmul.f32 %v554, %v562
      %v591 = vmul.f32 %v555, %v562
      %v592 = vmul.f32 %v556, %v562
      %v593 = vmul.f32 %v557, %v562
      %v594 = vmul.f32 %v558, %v562
      %v595 = vmul.f32 %v559, %v562
      %v596 = vsel %vm318, %v564, 0.0
      %597 = vadd.xlane.f32.xlu0 %v596
      %v598 = vpop.xlane.xlu0 %597
      %v599 = vsel %vm318, %v565, 0.0
      %600 = vadd.xlane.f32.xlu0 %v599
      %v601 = vpop.xlane.xlu0 %600
      %v602 = vsel %vm318, %v566, 0.0
      %603 = vadd.xlane.f32.xlu0 %v602
      %v604 = vpop.xlane.xlu0 %603
      %v605 = vsel %vm318, %v567, 0.0
      %606 = vadd.xlane.f32.xlu0 %v605
      %v607 = vpop.xlane.xlu0 %606
      %v608 = vsel %vm318, %v568, 0.0
      %609 = vadd.xlane.f32.xlu0 %v608
      %v610 = vpop.xlane.xlu0 %609
      %v611 = vsel %vm318, %v569, 0.0
      %612 = vadd.xlane.f32.xlu0 %v611
      %v613 = vpop.xlane.xlu0 %612
      %v614 = vsel %vm318, %v570, 0.0
      %615 = vadd.xlane.f32.xlu0 %v614
      %v616 = vpop.xlane.xlu0 %615
      %v617 = vsel %vm318, %v571, 0.0
      %618 = vadd.xlane.f32.xlu0 %v617
      %v619 = vpop.xlane.xlu0 %618
      %v620 = vsel %vm318, %v572, 0.0
      %621 = vadd.xlane.f32.xlu0 %v620
      %v622 = vpop.xlane.xlu0 %621
      %v623 = vsel %vm318, %v573, 0.0
      %624 = vadd.xlane.f32.xlu0 %v623
      %v625 = vpop.xlane.xlu0 %624
      %v626 = vsel %vm318, %v574, 0.0
      %627 = vadd.xlane.f32.xlu0 %v626
      %v628 = vpop.xlane.xlu0 %627
      %v629 = vsel %vm318, %v575, 0.0
      %630 = vadd.xlane.f32.xlu0 %v629
      %v631 = vpop.xlane.xlu0 %630
      %v632 = vsel %vm318, %v576, 0.0
      %633 = vadd.xlane.f32.xlu0 %v632
      %v634 = vpop.xlane.xlu0 %633
      %v635 = vsel %vm318, %v577, 0.0
      %636 = vadd.xlane.f32.xlu0 %v635
      %v637 = vpop.xlane.xlu0 %636
      %v638 = vsel %vm318, %v578, 0.0
      %639 = vadd.xlane.f32.xlu0 %v638
      %v640 = vpop.xlane.xlu0 %639
      %v641 = vsel %vm318, %v579, 0.0
      %642 = vadd.xlane.f32.xlu0 %v641
      %v643 = vpop.xlane.xlu0 %642
      %v644 = vsel %vm318, %v580, 0.0
      %645 = vadd.xlane.f32.xlu0 %v644
      %v646 = vpop.xlane.xlu0 %645
      %v647 = vsel %vm318, %v581, 0.0
      %648 = vadd.xlane.f32.xlu0 %v647
      %v649 = vpop.xlane.xlu0 %648
      %v650 = vsel %vm318, %v582, 0.0
      %651 = vadd.xlane.f32.xlu0 %v650
      %v652 = vpop.xlane.xlu0 %651
      %v653 = vsel %vm318, %v583, 0.0
      %654 = vadd.xlane.f32.xlu0 %v653
      %v655 = vpop.xlane.xlu0 %654
      %v656 = vsel %vm318, %v584, 0.0
      %657 = vadd.xlane.f32.xlu0 %v656
      %v658 = vpop.xlane.xlu0 %657
      %v659 = vsel %vm318, %v585, 0.0
      %660 = vadd.xlane.f32.xlu0 %v659
      %v661 = vpop.xlane.xlu0 %660
      %v662 = vsel %vm318, %v586, 0.0
      %663 = vadd.xlane.f32.xlu0 %v662
      %v664 = vpop.xlane.xlu0 %663
      %v665 = vsel %vm318, %v587, 0.0
      %666 = vadd.xlane.f32.xlu0 %v665
      %v667 = vpop.xlane.xlu0 %666
      %v668 = vsel %vm318, %v588, 0.0
      %669 = vadd.xlane.f32.xlu0 %v668
      %v670 = vpop.xlane.xlu0 %669
      %v671 = vsel %vm318, %v589, 0.0
      %672 = vadd.xlane.f32.xlu0 %v671
      %v673 = vpop.xlane.xlu0 %672
      %v674 = vsel %vm318, %v590, 0.0
      %675 = vadd.xlane.f32.xlu0 %v674
      %v676 = vpop.xlane.xlu0 %675
      %v677 = vsel %vm318, %v591, 0.0
      %678 = vadd.xlane.f32.xlu0 %v677
      %v679 = vpop.xlane.xlu0 %678
      %v680 = vsel %vm318, %v592, 0.0
      %681 = vadd.xlane.f32.xlu0 %v680
      %v682 = vpop.xlane.xlu0 %681
      %v683 = vsel %vm318, %v593, 0.0
      %684 = vadd.xlane.f32.xlu0 %v683
      %v685 = vpop.xlane.xlu0 %684
      %v686 = vsel %vm318, %v594, 0.0
      %687 = vadd.xlane.f32.xlu0 %v686
      %v688 = vpop.xlane.xlu0 %687
      %v689 = vsel %vm318, %v595, 0.0
      %690 = vadd.xlane.f32.xlu0 %v689
      %v691 = vpop.xlane.xlu0 %690
      %s692 = sld [smem:[#allocation2]]
      %v693 = vstv %s692
      %v694 = vadd.f32 %v598, %v693
      %v695 = vadd.f32 %v601, %v693
      %v696 = vadd.f32 %v604, %v693
      %v697 = vadd.f32 %v607, %v693
      %v698 = vadd.f32 %v610, %v693
      %v699 = vadd.f32 %v613, %v693
      %v700 = vadd.f32 %v616, %v693
      %v701 = vadd.f32 %v619, %v693
      %v702 = vadd.f32 %v622, %v693
      %v703 = vadd.f32 %v625, %v693
      %v704 = vadd.f32 %v628, %v693
      %v705 = vadd.f32 %v631, %v693
      %v706 = vadd.f32 %v634, %v693
      %v707 = vadd.f32 %v637, %v693
      %v708 = vadd.f32 %v640, %v693
      %v709 = vadd.f32 %v643, %v693
      %v710 = vadd.f32 %v646, %v693
      %v711 = vadd.f32 %v649, %v693
      %v712 = vadd.f32 %v652, %v693
      %v713 = vadd.f32 %v655, %v693
      %v714 = vadd.f32 %v658, %v693
      %v715 = vadd.f32 %v661, %v693
      %v716 = vadd.f32 %v664, %v693
      %v717 = vadd.f32 %v667, %v693
      %v718 = vadd.f32 %v670, %v693
      %v719 = vadd.f32 %v673, %v693
      %v720 = vadd.f32 %v676, %v693
      %v721 = vadd.f32 %v679, %v693
      %v722 = vadd.f32 %v682, %v693
      %v723 = vadd.f32 %v685, %v693
      %v724 = vadd.f32 %v688, %v693
      %v725 = vadd.f32 %v691, %v693
      %v726 = vld [vmem:[%s270] sm:$0xff]
      %v727 = vld [vmem:[%s270 + $0x8] sm:$0xff]
      %v728 = vld [vmem:[%s270 + $0x10] sm:$0xff]
      %v729 = vld [vmem:[%s270 + $0x18] sm:$0xff]
      %vm730 = vcmp.ne.s32.totalorder %v726, 0
      %vm731 = vcmp.ne.s32.totalorder %v727, 0
      %vm732 = vcmp.ne.s32.totalorder %v728, 0
      %vm733 = vcmp.ne.s32.totalorder %v729, 0
      %v766 = vlaneseq
      %v767 = vand.u32 %v766, 127
      %v768 = vperm.slane %v694, %v767
      %v769 = vperm.slane %v695, %v767
      %v770 = vperm.slane %v696, %v767
      %v771 = vperm.slane %v697, %v767
      %v772 = vperm.slane %v698, %v767
      %v773 = vperm.slane %v699, %v767
      %v774 = vperm.slane %v700, %v767
      %v775 = vperm.slane %v701, %v767
      %v776 = vperm.slane %v702, %v767
      %v777 = vperm.slane %v703, %v767
      %v778 = vperm.slane %v704, %v767
      %v779 = vperm.slane %v705, %v767
      %v780 = vperm.slane %v706, %v767
      %v781 = vperm.slane %v707, %v767
      %v782 = vperm.slane %v708, %v767
      %v783 = vperm.slane %v709, %v767
      %v784 = vperm.slane %v710, %v767
      %v785 = vperm.slane %v711, %v767
      %v786 = vperm.slane %v712, %v767
      %v787 = vperm.slane %v713, %v767
      %v788 = vperm.slane %v714, %v767
      %v789 = vperm.slane %v715, %v767
      %v790 = vperm.slane %v716, %v767
      %v791 = vperm.slane %v717, %v767
      %v792 = vperm.slane %v718, %v767
      %v793 = vperm.slane %v719, %v767
      %v794 = vperm.slane %v720, %v767
      %v795 = vperm.slane %v721, %v767
      %v796 = vperm.slane %v722, %v767
      %v797 = vperm.slane %v723, %v767
      %v798 = vperm.slane %v724, %v767
      %v799 = vperm.slane %v725, %v767
      %vm800 = vcmask 1041409
      %v801 = vsel %vm800, %v769, %v768
      %vm802 = vcmask 1042434
      %v803 = vsel %vm802, %v770, %v801
      %vm804 = vcmask 1043459
      %v805 = vsel %vm804, %v771, %v803
      %vm806 = vcmask 1044484
      %v807 = vsel %vm806, %v772, %v805
      %vm808 = vcmask 1045509
      %v809 = vsel %vm808, %v773, %v807
      %vm810 = vcmask 1046534
      %v811 = vsel %vm810, %v774, %v809
      %vm812 = vcmask 1047559
      %v813 = vsel %vm812, %v775, %v811
      %v814 = vsel %vm800, %v777, %v776
      %v815 = vsel %vm802, %v778, %v814
      %v816 = vsel %vm804, %v779, %v815
      %v817 = vsel %vm806, %v780, %v816
      %v818 = vsel %vm808, %v781, %v817
      %v819 = vsel %vm810, %v782, %v818
      %v820 = vsel %vm812, %v783, %v819
      %v821 = vsel %vm800, %v785, %v784
      %v822 = vsel %vm802, %v786, %v821
      %v823 = vsel %vm804, %v787, %v822
      %v824 = vsel %vm806, %v788, %v823
      %v825 = vsel %vm808, %v789, %v824
      %v826 = vsel %vm810, %v790, %v825
      %v827 = vsel %vm812, %v791, %v826
      %v828 = vsel %vm800, %v793, %v792
      %v829 = vsel %vm802, %v794, %v828
      %v830 = vsel %vm804, %v795, %v829
      %v831 = vsel %vm806, %v796, %v830
      %v832 = vsel %vm808, %v797, %v831
      %v833 = vsel %vm810, %v798, %v832
      %v834 = vsel %vm812, %v799, %v833
      %v839 = vsel %vm730, %v813, -inf
      %v840 = vsel %vm731, %v820, -inf
      %v841 = vsel %vm732, %v827, -inf
      %v842 = vsel %vm733, %v834, -inf
      %vm843 = vcmask 64512
      %v844 = vsel %vm843, %v839, -inf
      %845 = vmax.xlane.f32.xlu0 %v844
      %v846 = vpop.xlane.xlu0 %845
      %v847 = vsel %vm843, %v840, -inf
      %848 = vmax.xlane.f32.xlu0 %v847
      %v849 = vpop.xlane.xlu0 %848
      %v850 = vsel %vm843, %v841, -inf
      %851 = vmax.xlane.f32.xlu0 %v850
      %v852 = vpop.xlane.xlu0 %851
      %v853 = vsel %vm843, %v842, -inf
      %854 = vmax.xlane.f32.xlu0 %v853
      %v855 = vpop.xlane.xlu0 %854
      %v856 = vsub.f32 %v839, %v846
      %v857 = vsub.f32 %v840, %v849
      %v858 = vsub.f32 %v841, %v852
      %v859 = vsub.f32 %v842, %v855
      %v860 = vmul.f32 %v856, 1.442695
      %v861 = vpow.pop %v860
      %v862 = vmul.f32 %v857, 1.442695
      %v863 = vpow.pop %v862
      %v864 = vmul.f32 %v858, 1.442695
      %v865 = vpow.pop %v864
      %v866 = vmul.f32 %v859, 1.442695
      %v867 = vpow.pop %v866
      %v868 = vsel %vm843, %v861, 0.0
      %869 = vadd.xlane.f32.xlu0 %v868
      %v870 = vpop.xlane.xlu0 %869
      %v871 = vsel %vm843, %v863, 0.0
      %872 = vadd.xlane.f32.xlu0 %v871
      %v873 = vpop.xlane.xlu0 %872
      %v874 = vsel %vm843, %v865, 0.0
      %875 = vadd.xlane.f32.xlu0 %v874
      %v876 = vpop.xlane.xlu0 %875
      %v877 = vsel %vm843, %v867, 0.0
      %878 = vadd.xlane.f32.xlu0 %v877
      %v879 = vpop.xlane.xlu0 %878
      %v880 = vrcp.pop %v870
      %v881 = vmul.f32 %v870, %v880
      %v882 = vsub.f32 1.0, %v881
      %v883 = vmul.f32 %v880, %v882
      %v884 = vadd.f32 %v880, %v883
      %vm885 = vweird.f32 %v870
      %vm886 = vweird.f32 %v880
      %vm887 = vmor %vm885, %vm886
      %v888 = vsel %vm887, %v880, %v884
      %v889 = vand.u32 2147483647, %v870
      %vm890 = vcmp.eq.f32.partialorder %v889, 8.507059e+37
      %v891 = vand.u32 %v870, 2147483648
      %v892 = vor.u32 1.1754944e-38, %v891
      %v893 = vsel %vm890, %v892, %v888
      %v894 = vrcp.pop %v873
      %v895 = vmul.f32 %v873, %v894
      %v896 = vsub.f32 1.0, %v895
      %v897 = vmul.f32 %v894, %v896
      %v898 = vadd.f32 %v894, %v897
      %vm899 = vweird.f32 %v873
      %vm900 = vweird.f32 %v894
      %vm901 = vmor %vm899, %vm900
      %v902 = vsel %vm901, %v894, %v898
      %v903 = vand.u32 2147483647, %v873
      %vm904 = vcmp.eq.f32.partialorder %v903, 8.507059e+37
      %v905 = vand.u32 %v873, 2147483648
      %v906 = vor.u32 1.1754944e-38, %v905
      %v907 = vsel %vm904, %v906, %v902
      %v908 = vrcp.pop %v876
      %v909 = vmul.f32 %v876, %v908
      %v910 = vsub.f32 1.0, %v909
      %v911 = vmul.f32 %v908, %v910
      %v912 = vadd.f32 %v908, %v911
      %vm913 = vweird.f32 %v876
      %vm914 = vweird.f32 %v908
      %vm915 = vmor %vm913, %vm914
      %v916 = vsel %vm915, %v908, %v912
      %v917 = vand.u32 2147483647, %v876
      %vm918 = vcmp.eq.f32.partialorder %v917, 8.507059e+37
      %v919 = vand.u32 %v876, 2147483648
      %v920 = vor.u32 1.1754944e-38, %v919
      %v921 = vsel %vm918, %v920, %v916
      %v922 = vrcp.pop %v879
      %v923 = vmul.f32 %v879, %v922
      %v924 = vsub.f32 1.0, %v923
      %v925 = vmul.f32 %v922, %v924
      %v926 = vadd.f32 %v922, %v925
      %vm927 = vweird.f32 %v879
      %vm928 = vweird.f32 %v922
      %vm929 = vmor %vm927, %vm928
      %v930 = vsel %vm929, %v922, %v926
      %v931 = vand.u32 2147483647, %v879
      %vm932 = vcmp.eq.f32.partialorder %v931, 8.507059e+37
      %v933 = vand.u32 %v879, 2147483648
      %v934 = vor.u32 1.1754944e-38, %v933
      %v935 = vsel %vm932, %v934, %v930
      %v936 = vmul.f32 %v861, %v893
      %v937 = vmul.f32 %v863, %v907
      %v938 = vmul.f32 %v865, %v921
      %v939 = vmul.f32 %v867, %v935
      %v940 = vsel %vm730, %v936, 0.0
      %v941 = vsel %vm731, %v937, 0.0
      %v942 = vsel %vm732, %v938, 0.0
      %v943 = vsel %vm733, %v939, 0.0
      %v944 = vperm.slane %v940, 0
      %v945 = vlaneseq
      %v946 = vshrl.u32 %v945, 7
      %948 = vset.pattern.permute.xlu0 %v946
      %949 = vperm.xlu0 %948, %v944
      %v950 = vpop.permute.xlu0 %949
      %v951 = vperm.slane %v940, 1
      %v952 = vlaneseq
      %v953 = vshrl.u32 %v952, 7
      %955 = vset.pattern.permute.xlu0 %v953
      %956 = vperm.xlu0 %955, %v951
      %v957 = vpop.permute.xlu0 %956
      %v958 = vperm.slane %v940, 2
      %v959 = vlaneseq
      %v960 = vshrl.u32 %v959, 7
      %962 = vset.pattern.permute.xlu0 %v960
      %963 = vperm.xlu0 %962, %v958
      %v964 = vpop.permute.xlu0 %963
      %v965 = vperm.slane %v940, 3
      %v966 = vlaneseq
      %v967 = vshrl.u32 %v966, 7
      %969 = vset.pattern.permute.xlu0 %v967
      %970 = vperm.xlu0 %969, %v965
      %v971 = vpop.permute.xlu0 %970
      %v972 = vperm.slane %v940, 4
      %v973 = vlaneseq
      %v974 = vshrl.u32 %v973, 7
      %976 = vset.pattern.permute.xlu0 %v974
      %977 = vperm.xlu0 %976, %v972
      %v978 = vpop.permute.xlu0 %977
      %v979 = vperm.slane %v940, 5
      %v980 = vlaneseq
      %v981 = vshrl.u32 %v980, 7
      %983 = vset.pattern.permute.xlu0 %v981
      %984 = vperm.xlu0 %983, %v979
      %v985 = vpop.permute.xlu0 %984
      %v986 = vperm.slane %v940, 6
      %v987 = vlaneseq
      %v988 = vshrl.u32 %v987, 7
      %990 = vset.pattern.permute.xlu0 %v988
      %991 = vperm.xlu0 %990, %v986
      %v992 = vpop.permute.xlu0 %991
      %v993 = vperm.slane %v940, 7
      %v994 = vlaneseq
      %v995 = vshrl.u32 %v994, 7
      %997 = vset.pattern.permute.xlu0 %v995
      %998 = vperm.xlu0 %997, %v993
      %v999 = vpop.permute.xlu0 %998
      %v1000 = vperm.slane %v941, 0
      %v1001 = vlaneseq
      %v1002 = vshrl.u32 %v1001, 7
      %1004 = vset.pattern.permute.xlu0 %v1002
      %1005 = vperm.xlu0 %1004, %v1000
      %v1006 = vpop.permute.xlu0 %1005
      %v1007 = vperm.slane %v941, 1
      %v1008 = vlaneseq
      %v1009 = vshrl.u32 %v1008, 7
      %1011 = vset.pattern.permute.xlu0 %v1009
      %1012 = vperm.xlu0 %1011, %v1007
      %v1013 = vpop.permute.xlu0 %1012
      %v1014 = vperm.slane %v941, 2
      %v1015 = vlaneseq
      %v1016 = vshrl.u32 %v1015, 7
      %1018 = vset.pattern.permute.xlu0 %v1016
      %1019 = vperm.xlu0 %1018, %v1014
      %v1020 = vpop.permute.xlu0 %1019
      %v1021 = vperm.slane %v941, 3
      %v1022 = vlaneseq
      %v1023 = vshrl.u32 %v1022, 7
      %1025 = vset.pattern.permute.xlu0 %v1023
      %1026 = vperm.xlu0 %1025, %v1021
      %v1027 = vpop.permute.xlu0 %1026
      %v1028 = vperm.slane %v941, 4
      %v1029 = vlaneseq
      %v1030 = vshrl.u32 %v1029, 7
      %1032 = vset.pattern.permute.xlu0 %v1030
      %1033 = vperm.xlu0 %1032, %v1028
      %v1034 = vpop.permute.xlu0 %1033
      %v1035 = vperm.slane %v941, 5
      %v1036 = vlaneseq
      %v1037 = vshrl.u32 %v1036, 7
      %1039 = vset.pattern.permute.xlu0 %v1037
      %1040 = vperm.xlu0 %1039, %v1035
      %v1041 = vpop.permute.xlu0 %1040
      %v1042 = vperm.slane %v941, 6
      %v1043 = vlaneseq
      %v1044 = vshrl.u32 %v1043, 7
      %1046 = vset.pattern.permute.xlu0 %v1044
      %1047 = vperm.xlu0 %1046, %v1042
      %v1048 = vpop.permute.xlu0 %1047
      %v1049 = vperm.slane %v941, 7
      %v1050 = vlaneseq
      %v1051 = vshrl.u32 %v1050, 7
      %1053 = vset.pattern.permute.xlu0 %v1051
      %1054 = vperm.xlu0 %1053, %v1049
      %v1055 = vpop.permute.xlu0 %1054
      %v1056 = vperm.slane %v942, 0
      %v1057 = vlaneseq
      %v1058 = vshrl.u32 %v1057, 7
      %1060 = vset.pattern.permute.xlu0 %v1058
      %1061 = vperm.xlu0 %1060, %v1056
      %v1062 = vpop.permute.xlu0 %1061
      %v1063 = vperm.slane %v942, 1
      %v1064 = vlaneseq
      %v1065 = vshrl.u32 %v1064, 7
      %1067 = vset.pattern.permute.xlu0 %v1065
      %1068 = vperm.xlu0 %1067, %v1063
      %v1069 = vpop.permute.xlu0 %1068
      %v1070 = vperm.slane %v942, 2
      %v1071 = vlaneseq
      %v1072 = vshrl.u32 %v1071, 7
      %1074 = vset.pattern.permute.xlu0 %v1072
      %1075 = vperm.xlu0 %1074, %v1070
      %v1076 = vpop.permute.xlu0 %1075
      %v1077 = vperm.slane %v942, 3
      %v1078 = vlaneseq
      %v1079 = vshrl.u32 %v1078, 7
      %1081 = vset.pattern.permute.xlu0 %v1079
      %1082 = vperm.xlu0 %1081, %v1077
      %v1083 = vpop.permute.xlu0 %1082
      %v1084 = vperm.slane %v942, 4
      %v1085 = vlaneseq
      %v1086 = vshrl.u32 %v1085, 7
      %1088 = vset.pattern.permute.xlu0 %v1086
      %1089 = vperm.xlu0 %1088, %v1084
      %v1090 = vpop.permute.xlu0 %1089
      %v1091 = vperm.slane %v942, 5
      %v1092 = vlaneseq
      %v1093 = vshrl.u32 %v1092, 7
      %1095 = vset.pattern.permute.xlu0 %v1093
      %1096 = vperm.xlu0 %1095, %v1091
      %v1097 = vpop.permute.xlu0 %1096
      %v1098 = vperm.slane %v942, 6
      %v1099 = vlaneseq
      %v1100 = vshrl.u32 %v1099, 7
      %1102 = vset.pattern.permute.xlu0 %v1100
      %1103 = vperm.xlu0 %1102, %v1098
      %v1104 = vpop.permute.xlu0 %1103
      %v1105 = vperm.slane %v942, 7
      %v1106 = vlaneseq
      %v1107 = vshrl.u32 %v1106, 7
      %1109 = vset.pattern.permute.xlu0 %v1107
      %1110 = vperm.xlu0 %1109, %v1105
      %v1111 = vpop.permute.xlu0 %1110
      %v1112 = vperm.slane %v943, 0
      %v1113 = vlaneseq
      %v1114 = vshrl.u32 %v1113, 7
      %1116 = vset.pattern.permute.xlu0 %v1114
      %1117 = vperm.xlu0 %1116, %v1112
      %v1118 = vpop.permute.xlu0 %1117
      %v1119 = vperm.slane %v943, 1
      %v1120 = vlaneseq
      %v1121 = vshrl.u32 %v1120, 7
      %1123 = vset.pattern.permute.xlu0 %v1121
      %1124 = vperm.xlu0 %1123, %v1119
      %v1125 = vpop.permute.xlu0 %1124
      %v1126 = vperm.slane %v943, 2
      %v1127 = vlaneseq
      %v1128 = vshrl.u32 %v1127, 7
      %1130 = vset.pattern.permute.xlu0 %v1128
      %1131 = vperm.xlu0 %1130, %v1126
      %v1132 = vpop.permute.xlu0 %1131
      %v1133 = vperm.slane %v943, 3
      %v1134 = vlaneseq
      %v1135 = vshrl.u32 %v1134, 7
      %1137 = vset.pattern.permute.xlu0 %v1135
      %1138 = vperm.xlu0 %1137, %v1133
      %v1139 = vpop.permute.xlu0 %1138
      %v1140 = vperm.slane %v943, 4
      %v1141 = vlaneseq
      %v1142 = vshrl.u32 %v1141, 7
      %1144 = vset.pattern.permute.xlu0 %v1142
      %1145 = vperm.xlu0 %1144, %v1140
      %v1146 = vpop.permute.xlu0 %1145
      %v1147 = vperm.slane %v943, 5
      %v1148 = vlaneseq
      %v1149 = vshrl.u32 %v1148, 7
      %1151 = vset.pattern.permute.xlu0 %v1149
      %1152 = vperm.xlu0 %1151, %v1147
      %v1153 = vpop.permute.xlu0 %1152
      %v1154 = vperm.slane %v943, 6
      %v1155 = vlaneseq
      %v1156 = vshrl.u32 %v1155, 7
      %1158 = vset.pattern.permute.xlu0 %v1156
      %1159 = vperm.xlu0 %1158, %v1154
      %v1160 = vpop.permute.xlu0 %1159
      %v1161 = vperm.slane %v943, 7
      %v1162 = vlaneseq
      %v1163 = vshrl.u32 %v1162, 7
      %1165 = vset.pattern.permute.xlu0 %v1163
      %1166 = vperm.xlu0 %1165, %v1161
      %v1167 = vpop.permute.xlu0 %1166
      %v1168 = vmul.f32 %v278, %v950
      %v1169 = vmul.f32 %v279, %v957
      %v1170 = vmul.f32 %v280, %v964
      %v1171 = vmul.f32 %v281, %v971
      %v1172 = vmul.f32 %v282, %v978
      %v1173 = vmul.f32 %v283, %v985
      %v1174 = vmul.f32 %v284, %v992
      %v1175 = vmul.f32 %v285, %v999
      %v1176 = vmul.f32 %v286, %v1006
      %v1177 = vmul.f32 %v287, %v1013
      %v1178 = vmul.f32 %v288, %v1020
      %v1179 = vmul.f32 %v289, %v1027
      %v1180 = vmul.f32 %v290, %v1034
      %v1181 = vmul.f32 %v291, %v1041
      %v1182 = vmul.f32 %v292, %v1048
      %v1183 = vmul.f32 %v293, %v1055
      %v1184 = vmul.f32 %v294, %v1062
      %v1185 = vmul.f32 %v295, %v1069
      %v1186 = vmul.f32 %v296, %v1076
      %v1187 = vmul.f32 %v297, %v1083
      %v1188 = vmul.f32 %v298, %v1090
      %v1189 = vmul.f32 %v299, %v1097
      %v1190 = vmul.f32 %v300, %v1104
      %v1191 = vmul.f32 %v301, %v1111
      %v1192 = vmul.f32 %v302, %v1118
      %v1193 = vmul.f32 %v303, %v1125
      %v1194 = vmul.f32 %v304, %v1132
      %v1195 = vmul.f32 %v305, %v1139
      %v1196 = vmul.f32 %v306, %v1146
      %v1197 = vmul.f32 %v307, %v1153
      %v1198 = vmul.f32 %v308, %v1160
      %v1199 = vmul.f32 %v309, %v1167
      %v1200 = vsel %vm318, %v1168, 0.0
      %v1201 = vrot.slane %v1200, 4
      %v1202 = vadd.f32 %v1200, %v1201
      %v1203 = vrot.slane %v1202, 2
      %v1204 = vadd.f32 %v1202, %v1203
      %v1205 = vrot.slane %v1204, 1
      %v1206 = vadd.f32 %v1204, %v1205
      %v1207 = vsel %vm318, %v1169, 0.0
      %v1208 = vrot.slane %v1207, 4
      %v1209 = vadd.f32 %v1207, %v1208
      %v1210 = vrot.slane %v1209, 2
      %v1211 = vadd.f32 %v1209, %v1210
      %v1212 = vrot.slane %v1211, 1
      %v1213 = vadd.f32 %v1211, %v1212
      %v1214 = vsel %vm318, %v1170, 0.0
      %v1215 = vrot.slane %v1214, 4
      %v1216 = vadd.f32 %v1214, %v1215
      %v1217 = vrot.slane %v1216, 2
      %v1218 = vadd.f32 %v1216, %v1217
      %v1219 = vrot.slane %v1218, 1
      %v1220 = vadd.f32 %v1218, %v1219
      %v1221 = vsel %vm318, %v1171, 0.0
      %v1222 = vrot.slane %v1221, 4
      %v1223 = vadd.f32 %v1221, %v1222
      %v1224 = vrot.slane %v1223, 2
      %v1225 = vadd.f32 %v1223, %v1224
      %v1226 = vrot.slane %v1225, 1
      %v1227 = vadd.f32 %v1225, %v1226
      %v1228 = vsel %vm318, %v1172, 0.0
      %v1229 = vrot.slane %v1228, 4
      %v1230 = vadd.f32 %v1228, %v1229
      %v1231 = vrot.slane %v1230, 2
      %v1232 = vadd.f32 %v1230, %v1231
      %v1233 = vrot.slane %v1232, 1
      %v1234 = vadd.f32 %v1232, %v1233
      %v1235 = vsel %vm318, %v1173, 0.0
      %v1236 = vrot.slane %v1235, 4
      %v1237 = vadd.f32 %v1235, %v1236
      %v1238 = vrot.slane %v1237, 2
      %v1239 = vadd.f32 %v1237, %v1238
      %v1240 = vrot.slane %v1239, 1
      %v1241 = vadd.f32 %v1239, %v1240
      %v1242 = vsel %vm318, %v1174, 0.0
      %v1243 = vrot.slane %v1242, 4
      %v1244 = vadd.f32 %v1242, %v1243
      %v1245 = vrot.slane %v1244, 2
      %v1246 = vadd.f32 %v1244, %v1245
      %v1247 = vrot.slane %v1246, 1
      %v1248 = vadd.f32 %v1246, %v1247
      %v1249 = vsel %vm318, %v1175, 0.0
      %v1250 = vrot.slane %v1249, 4
      %v1251 = vadd.f32 %v1249, %v1250
      %v1252 = vrot.slane %v1251, 2
      %v1253 = vadd.f32 %v1251, %v1252
      %v1254 = vrot.slane %v1253, 1
      %v1255 = vadd.f32 %v1253, %v1254
      %v1256 = vsel %vm318, %v1176, 0.0
      %v1257 = vrot.slane %v1256, 4
      %v1258 = vadd.f32 %v1256, %v1257
      %v1259 = vrot.slane %v1258, 2
      %v1260 = vadd.f32 %v1258, %v1259
      %v1261 = vrot.slane %v1260, 1
      %v1262 = vadd.f32 %v1260, %v1261
      %v1263 = vsel %vm318, %v1177, 0.0
      %v1264 = vrot.slane %v1263, 4
      %v1265 = vadd.f32 %v1263, %v1264
      %v1266 = vrot.slane %v1265, 2
      %v1267 = vadd.f32 %v1265, %v1266
      %v1268 = vrot.slane %v1267, 1
      %v1269 = vadd.f32 %v1267, %v1268
      %v1270 = vsel %vm318, %v1178, 0.0
      %v1271 = vrot.slane %v1270, 4
      %v1272 = vadd.f32 %v1270, %v1271
      %v1273 = vrot.slane %v1272, 2
      %v1274 = vadd.f32 %v1272, %v1273
      %v1275 = vrot.slane %v1274, 1
      %v1276 = vadd.f32 %v1274, %v1275
      %v1277 = vsel %vm318, %v1179, 0.0
      %v1278 = vrot.slane %v1277, 4
      %v1279 = vadd.f32 %v1277, %v1278
      %v1280 = vrot.slane %v1279, 2
      %v1281 = vadd.f32 %v1279, %v1280
      %v1282 = vrot.slane %v1281, 1
      %v1283 = vadd.f32 %v1281, %v1282
      %v1284 = vsel %vm318, %v1180, 0.0
      %v1285 = vrot.slane %v1284, 4
      %v1286 = vadd.f32 %v1284, %v1285
      %v1287 = vrot.slane %v1286, 2
      %v1288 = vadd.f32 %v1286, %v1287
      %v1289 = vrot.slane %v1288, 1
      %v1290 = vadd.f32 %v1288, %v1289
      %v1291 = vsel %vm318, %v1181, 0.0
      %v1292 = vrot.slane %v1291, 4
      %v1293 = vadd.f32 %v1291, %v1292
      %v1294 = vrot.slane %v1293, 2
      %v1295 = vadd.f32 %v1293, %v1294
      %v1296 = vrot.slane %v1295, 1
      %v1297 = vadd.f32 %v1295, %v1296
      %v1298 = vsel %vm318, %v1182, 0.0
      %v1299 = vrot.slane %v1298, 4
      %v1300 = vadd.f32 %v1298, %v1299
      %v1301 = vrot.slane %v1300, 2
      %v1302 = vadd.f32 %v1300, %v1301
      %v1303 = vrot.slane %v1302, 1
      %v1304 = vadd.f32 %v1302, %v1303
      %v1305 = vsel %vm318, %v1183, 0.0
      %v1306 = vrot.slane %v1305, 4
      %v1307 = vadd.f32 %v1305, %v1306
      %v1308 = vrot.slane %v1307, 2
      %v1309 = vadd.f32 %v1307, %v1308
      %v1310 = vrot.slane %v1309, 1
      %v1311 = vadd.f32 %v1309, %v1310
      %v1312 = vsel %vm318, %v1184, 0.0
      %v1313 = vrot.slane %v1312, 4
      %v1314 = vadd.f32 %v1312, %v1313
      %v1315 = vrot.slane %v1314, 2
      %v1316 = vadd.f32 %v1314, %v1315
      %v1317 = vrot.slane %v1316, 1
      %v1318 = vadd.f32 %v1316, %v1317
      %v1319 = vsel %vm318, %v1185, 0.0
      %v1320 = vrot.slane %v1319, 4
      %v1321 = vadd.f32 %v1319, %v1320
      %v1322 = vrot.slane %v1321, 2
      %v1323 = vadd.f32 %v1321, %v1322
      %v1324 = vrot.slane %v1323, 1
      %v1325 = vadd.f32 %v1323, %v1324
      %v1326 = vsel %vm318, %v1186, 0.0
      %v1327 = vrot.slane %v1326, 4
      %v1328 = vadd.f32 %v1326, %v1327
      %v1329 = vrot.slane %v1328, 2
      %v1330 = vadd.f32 %v1328, %v1329
      %v1331 = vrot.slane %v1330, 1
      %v1332 = vadd.f32 %v1330, %v1331
      %v1333 = vsel %vm318, %v1187, 0.0
      %v1334 = vrot.slane %v1333, 4
      %v1335 = vadd.f32 %v1333, %v1334
      %v1336 = vrot.slane %v1335, 2
      %v1337 = vadd.f32 %v1335, %v1336
      %v1338 = vrot.slane %v1337, 1
      %v1339 = vadd.f32 %v1337, %v1338
      %v1340 = vsel %vm318, %v1188, 0.0
      %v1341 = vrot.slane %v1340, 4
      %v1342 = vadd.f32 %v1340, %v1341
      %v1343 = vrot.slane %v1342, 2
      %v1344 = vadd.f32 %v1342, %v1343
      %v1345 = vrot.slane %v1344, 1
      %v1346 = vadd.f32 %v1344, %v1345
      %v1347 = vsel %vm318, %v1189, 0.0
      %v1348 = vrot.slane %v1347, 4
      %v1349 = vadd.f32 %v1347, %v1348
      %v1350 = vrot.slane %v1349, 2
      %v1351 = vadd.f32 %v1349, %v1350
      %v1352 = vrot.slane %v1351, 1
      %v1353 = vadd.f32 %v1351, %v1352
      %v1354 = vsel %vm318, %v1190, 0.0
      %v1355 = vrot.slane %v1354, 4
      %v1356 = vadd.f32 %v1354, %v1355
      %v1357 = vrot.slane %v1356, 2
      %v1358 = vadd.f32 %v1356, %v1357
      %v1359 = vrot.slane %v1358, 1
      %v1360 = vadd.f32 %v1358, %v1359
      %v1361 = vsel %vm318, %v1191, 0.0
      %v1362 = vrot.slane %v1361, 4
      %v1363 = vadd.f32 %v1361, %v1362
      %v1364 = vrot.slane %v1363, 2
      %v1365 = vadd.f32 %v1363, %v1364
      %v1366 = vrot.slane %v1365, 1
      %v1367 = vadd.f32 %v1365, %v1366
      %v1368 = vsel %vm318, %v1192, 0.0
      %v1369 = vrot.slane %v1368, 4
      %v1370 = vadd.f32 %v1368, %v1369
      %v1371 = vrot.slane %v1370, 2
      %v1372 = vadd.f32 %v1370, %v1371
      %v1373 = vrot.slane %v1372, 1
      %v1374 = vadd.f32 %v1372, %v1373
      %v1375 = vsel %vm318, %v1193, 0.0
      %v1376 = vrot.slane %v1375, 4
      %v1377 = vadd.f32 %v1375, %v1376
      %v1378 = vrot.slane %v1377, 2
      %v1379 = vadd.f32 %v1377, %v1378
      %v1380 = vrot.slane %v1379, 1
      %v1381 = vadd.f32 %v1379, %v1380
      %v1382 = vsel %vm318, %v1194, 0.0
      %v1383 = vrot.slane %v1382, 4
      %v1384 = vadd.f32 %v1382, %v1383
      %v1385 = vrot.slane %v1384, 2
      %v1386 = vadd.f32 %v1384, %v1385
      %v1387 = vrot.slane %v1386, 1
      %v1388 = vadd.f32 %v1386, %v1387
      %v1389 = vsel %vm318, %v1195, 0.0
      %v1390 = vrot.slane %v1389, 4
      %v1391 = vadd.f32 %v1389, %v1390
      %v1392 = vrot.slane %v1391, 2
      %v1393 = vadd.f32 %v1391, %v1392
      %v1394 = vrot.slane %v1393, 1
      %v1395 = vadd.f32 %v1393, %v1394
      %v1396 = vsel %vm318, %v1196, 0.0
      %v1397 = vrot.slane %v1396, 4
      %v1398 = vadd.f32 %v1396, %v1397
      %v1399 = vrot.slane %v1398, 2
      %v1400 = vadd.f32 %v1398, %v1399
      %v1401 = vrot.slane %v1400, 1
      %v1402 = vadd.f32 %v1400, %v1401
      %v1403 = vsel %vm318, %v1197, 0.0
      %v1404 = vrot.slane %v1403, 4
      %v1405 = vadd.f32 %v1403, %v1404
      %v1406 = vrot.slane %v1405, 2
      %v1407 = vadd.f32 %v1405, %v1406
      %v1408 = vrot.slane %v1407, 1
      %v1409 = vadd.f32 %v1407, %v1408
      %v1410 = vsel %vm318, %v1198, 0.0
      %v1411 = vrot.slane %v1410, 4
      %v1412 = vadd.f32 %v1410, %v1411
      %v1413 = vrot.slane %v1412, 2
      %v1414 = vadd.f32 %v1412, %v1413
      %v1415 = vrot.slane %v1414, 1
      %v1416 = vadd.f32 %v1414, %v1415
      %v1417 = vsel %vm318, %v1199, 0.0
      %v1418 = vrot.slane %v1417, 4
      %v1419 = vadd.f32 %v1417, %v1418
      %v1420 = vrot.slane %v1419, 2
      %v1421 = vadd.f32 %v1419, %v1420
      %v1422 = vrot.slane %v1421, 1
      %v1423 = vadd.f32 %v1421, %v1422
      %v1456 = vsel %vm800, %v1213, %v1206
      %v1457 = vsel %vm802, %v1220, %v1456
      %v1458 = vsel %vm804, %v1227, %v1457
      %v1459 = vsel %vm806, %v1234, %v1458
      %v1460 = vsel %vm808, %v1241, %v1459
      %v1461 = vsel %vm810, %v1248, %v1460
      %v1462 = vsel %vm812, %v1255, %v1461
      %v1463 = vsel %vm800, %v1269, %v1262
      %v1464 = vsel %vm802, %v1276, %v1463
      %v1465 = vsel %vm804, %v1283, %v1464
      %v1466 = vsel %vm806, %v1290, %v1465
      %v1467 = vsel %vm808, %v1297, %v1466
      %v1468 = vsel %vm810, %v1304, %v1467
      %v1469 = vsel %vm812, %v1311, %v1468
      %v1470 = vsel %vm800, %v1325, %v1318
      %v1471 = vsel %vm802, %v1332, %v1470
      %v1472 = vsel %vm804, %v1339, %v1471
      %v1473 = vsel %vm806, %v1346, %v1472
      %v1474 = vsel %vm808, %v1353, %v1473
      %v1475 = vsel %vm810, %v1360, %v1474
      %v1476 = vsel %vm812, %v1367, %v1475
      %v1477 = vsel %vm800, %v1381, %v1374
      %v1478 = vsel %vm802, %v1388, %v1477
      %v1479 = vsel %vm804, %v1395, %v1478
      %v1480 = vsel %vm806, %v1402, %v1479
      %v1481 = vsel %vm808, %v1409, %v1480
      %v1482 = vsel %vm810, %v1416, %v1481
      %v1483 = vsel %vm812, %v1423, %v1482
      %1488 = vst.msk [vmem:[%s276] sm:$0xff] %vm318, %v1462
      %1489 = vst.msk [vmem:[%s276 + $0x8] sm:$0xff] %vm318, %v1469
      %1490 = vst.msk [vmem:[%s276 + $0x10] sm:$0xff] %vm318, %v1476
      %1491 = vst.msk [vmem:[%s276 + $0x18] sm:$0xff] %vm318, %v1483
      %s1492 = smul.u32 4, %s18
      %p1493 = scmp.lt.s32.totalorder %s1492, 15
      %s1494 = scalar_select %p1493, %s1492, 15
      %s1495 = smul.addr %s1494, 8
      %s1496 = scalar_lea.vmem %s6, %s1495
      // Predicated region
      $region45: #{tpu_custom_call.1} parent=43 // pred_check
        %p1497 = pneg %p172
      $region46: #{tpu_custom_call.1} parent=43 // pred_check_branch
        %1499 = sbr.rel (%p1497) target = $region48
      $region47: #{tpu_custom_call.1} parent=43 // pred_region
        %s1500 = smul.u32 4, %s18
      $region48: #{tpu_custom_call.1} parent=43 // pred_fallthru
        _
    $region44: #{tpu_custom_call.1} parent=5 // pred_fallthru
      _
    %p1501 = scmp.le.s32.totalorder 2, %s13
    // Predicated region
    $region49: #{tpu_custom_call.1} parent=5 // pred_check
      %p1502 = pneg %p1501
    $region50: #{tpu_custom_call.1} parent=5 // pred_check_branch
      %1504 = sbr.rel (%p1502) target = $region52
    $region51: #{tpu_custom_call.1} parent=5 // pred_region
      %s1505 = ssub.s32 %s13, 2
      // Predicated region
      $region53: #{tpu_custom_call.1} parent=51 // pred_check
        %p1506 = pneg %p178
      $region54: #{tpu_custom_call.1} parent=51 // pred_check_branch
        %1508 = sbr.rel (%p1506) target = $region56
      $region55: #{tpu_custom_call.1} parent=51 // pred_region
        %s1509 = smul.u32 4, %s19
        %p1510 = scmp.lt.s32.totalorder %s1509, 15
        %s1511 = scalar_select %p1510, %s1509, 15
        %s1512 = smul.addr %s1511, 8
        %s1513 = scalar_lea.vmem %s6, %s1512
      $region56: #{tpu_custom_call.1} parent=51 // pred_fallthru
        _
    $region52: #{tpu_custom_call.1} parent=5 // pred_fallthru
      _
  $region6: #{tpu_custom_call.1} parent=0 // loop_footer
    %s17 = sadd.s32 1, %s13
  $region7: #{tpu_custom_call.1} parent=0 // loop_footer_branch
    %12 = sbr.rel target = $region3
  $region8: #{tpu_custom_call.1} parent=0 // loop_exit
    _

</llo_original>
